<compile_context>
chip_gen: v6e
topology: v6e:2x2x1
jax: 0.10.0
libtpu: 0.0.40
codegen_flags: <defaults>
</compile_context>

<pallas_src>
import functools

import jax
import jax.numpy as jnp
import numpy as np
from jax.experimental import pallas as pl
from jax.experimental.pallas import tpu as pltpu


# ----------------------------------------------------------------------------
# cos/sin cache construction (mirrors RotaryEmbedding.__init__ buffers)
# ----------------------------------------------------------------------------
def compute_cos_sin_cache(rotary_dim, max_position_embeddings, base, dtype):
    inv_freq = 1.0 / (
        base ** (jnp.arange(0, rotary_dim, 2, dtype=jnp.float32) / rotary_dim)
    )
    t = jnp.arange(max_position_embeddings, dtype=jnp.float32)
    freqs = jnp.einsum("i,j->ij", t, inv_freq)            # [max_pos, rotary_dim//2]
    cache = jnp.concatenate([jnp.cos(freqs), jnp.sin(freqs)], axis=-1)
    return cache.astype(dtype)                             # [max_pos, rotary_dim]


# ----------------------------------------------------------------------------
# Pallas kernel: rotary embedding on one token-tile of flattened query / key.
#   coef_ref : [bt, 2*rotary_dim] f32  (NeoX:  [cos | cos | -sin | sin])
#              [bt,   rotary_dim] f32  (GPT-J: [cos | sin])
#   q_ref    : [bt, num_q_heads  * head_size]
#   k_ref    : [bt, num_kv_heads * head_size]
# ----------------------------------------------------------------------------
def _rope_kernel(coef_ref, q_ref, k_ref, qo_ref, ko_ref, *,
                 head_size, rotary_dim, is_neox_style):
    half = rotary_dim // 2
    # Fast roll path only when the rotary segment is lane-aligned; otherwise use
    # plain (proven-to-lower) value slices + concat.
    use_roll = is_neox_style and (rotary_dim % 128 == 0)

    coef = coef_ref[...]                          # loaded ONCE, shared by q and k
    if is_neox_style:
        cos_full = coef[:, :rotary_dim]           # [cos | cos]
        sin_signed = coef[:, rotary_dim:]         # [-sin | sin]
        if not use_roll:
            cos_half = cos_full[:, :half]
            sin_half = sin_signed[:, half:]       # +sin
    else:
        cos_half = coef[:, :half]
        sin_half = coef[:, half:]

    def apply(x_ref, o_ref):
        x = x_ref[...]                            # [bt, H*head_size]  (lane-dense)
        num_heads = x_ref.shape[1] // head_size
        parts = []
        for h in range(num_heads):
            base = h * head_size
            xr = x[:, base:base + rotary_dim].astype(jnp.float32)
            if is_neox_style:
                if use_roll:
                    # roll by rotary_dim//2 swaps the two halves (self-inverse, so
                    # it is independent of the roll sign convention).
                    rot = xr * cos_full + pltpu.roll(xr, half, 1) * sin_signed
                else:
                    x1 = xr[:, :half]
                    x2 = xr[:, half:]
                    rot = jnp.concatenate(
                        [x1 * cos_half - x2 * sin_half,
                         x2 * cos_half + x1 * sin_half], axis=-1)
            else:
                # TODO(synk): GPT-J interleaved path kept in reference form
                # (strided value slices); not lane-optimized.
                x1 = xr[:, 0::2]
                x2 = xr[:, 1::2]
                o1 = x1 * cos_half - x2 * sin_half
                o2 = x2 * cos_half + x1 * sin_half
                rot = jnp.stack([o1, o2], axis=-1).reshape(xr.shape[0], rotary_dim)
            parts.append(rot.astype(x.dtype))
            if rotary_dim < head_size:
                # Pass-through tail in its original dtype (no f32 round-trip).
                parts.append(x[:, base + rotary_dim:base + head_size])
        out = parts[0] if len(parts) == 1 else jnp.concatenate(parts, axis=-1)
        o_ref[...] = out                          # single full-width dense store

    apply(q_ref, qo_ref)
    apply(k_ref, ko_ref)


# ----------------------------------------------------------------------------
# Wrapper: reproduces RotaryEmbedding.forward semantics.
# ----------------------------------------------------------------------------
def _round_up(x, m):
    return ((x + m - 1) // m) * m


def rotary_embedding_forward(positions, query, key, cos_sin_cache, *,
                             head_size, rotary_dim, is_neox_style,
                             offsets=None, block_tokens=None):
    if offsets is not None:
        positions = positions + offsets
    positions = positions.reshape(-1)
    num_tokens = positions.shape[0]

    # Per-token cos/sin gather (index_select).  Small; left to XLA.
    cos_sin = jnp.take(cos_sin_cache, positions, axis=0).astype(jnp.float32)
    cos, sin = jnp.split(cos_sin, 2, axis=-1)              # each [T, rotary_dim//2]
    if is_neox_style:
        coef = jnp.concatenate([cos, cos, -sin, sin], axis=-1)   # [T, 2*rotary_dim]
    else:
        coef = jnp.concatenate([cos, sin], axis=-1)              # [T, rotary_dim]

    query_shape = query.shape
    key_shape = key.shape
    q2 = query.reshape(num_tokens, -1)   # [T, Hq  * head_size]  (natural layout)
    k2 = key.reshape(num_tokens, -1)     # [T, Hkv * head_size]
    num_q_heads = q2.shape[1] // head_size
    num_kv_heads = k2.shape[1] // head_size

    # ---- token-tile sizing: large tiles, budgeted against this chip's VMEM ----
    try:
        info = pltpu.get_tpu_info()
        vmem_cap = int(getattr(info, "vmem_capacity_bytes", 64 * 1024 * 1024))
    except Exception:
        vmem_cap = 64 * 1024 * 1024
    vmem_limit = int(min(vmem_cap * 3 // 4, 96 * 1024 * 1024))  # 96MiB v5e/v6e, 48MiB v7x

    q_isz = jnp.dtype(query.dtype).itemsize
    k_isz = jnp.dtype(key.dtype).itemsize
    # double-buffered (in + out) bytes per token per grid step
    per_token_bytes = 2 * (coef.shape[1] * 4
                           + 2 * (q2.shape[1] * q_isz + k2.shape[1] * k_isz))
    budget = int(vmem_limit * 0.7)
    max_bt = max(8, (budget // per_token_bytes) // 8 * 8)

    if block_tokens is None:
        block_tokens = 512                        # big default; HBM-bandwidth bound
    t_min = _round_up(num_tokens, 8)
    bt = min(block_tokens, max_bt, t_min)
    bt = max(8, (bt // 8) * 8)
    t_pad = _round_up(num_tokens, bt)

    if t_pad != num_tokens:                       # ragged last tile -> zero-pad
        pad = t_pad - num_tokens
        coef = jnp.pad(coef, ((0, pad), (0, 0)))
        q2 = jnp.pad(q2, ((0, pad), (0, 0)))
        k2 = jnp.pad(k2, ((0, pad), (0, 0)))

    kernel = functools.partial(
        _rope_kernel,
        head_size=head_size,
        rotary_dim=rotary_dim,
        is_neox_style=is_neox_style,
    )

    q_out, k_out = pl.pallas_call(
        kernel,
        out_shape=(
            jax.ShapeDtypeStruct((t_pad, num_q_heads * head_size), query.dtype),
            jax.ShapeDtypeStruct((t_pad, num_kv_heads * head_size), key.dtype),
        ),
        grid_spec=pltpu.PrefetchScalarGridSpec(
            num_scalar_prefetch=0,
            grid=(t_pad // bt,),
            in_specs=[
                pl.BlockSpec((bt, coef.shape[1]), lambda i: (i, 0)),
                pl.BlockSpec((bt, num_q_heads * head_size), lambda i: (i, 0)),
                pl.BlockSpec((bt, num_kv_heads * head_size), lambda i: (i, 0)),
            ],
            out_specs=[
                pl.BlockSpec((bt, num_q_heads * head_size), lambda i: (i, 0)),
                pl.BlockSpec((bt, num_kv_heads * head_size), lambda i: (i, 0)),
            ],
        ),
        compiler_params=pltpu.CompilerParams(
            dimension_semantics=("parallel",),
            vmem_limit_bytes=vmem_limit,
        ),
        input_output_aliases={1: 0, 2: 1},        # q -> q_out, k -> k_out (in-place)
    )(coef, q2, k2)

    if t_pad != num_tokens:
        q_out = q_out[:num_tokens]
        k_out = k_out[:num_tokens]
    return q_out.reshape(query_shape), k_out.reshape(key_shape)


# ----------------------------------------------------------------------------
# Pure-JAX reference (mirrors the PyTorch module) for a correctness check.
# ----------------------------------------------------------------------------
def _apply_rotary_emb_ref(x, cos, sin, is_neox_style):
    cos = cos[:, None, :].astype(x.dtype)
    sin = sin[:, None, :].astype(x.dtype)
    if is_neox_style:
        x1, x2 = jnp.split(x, 2, axis=-1)
    else:
        x1 = x[..., ::2]
        x2 = x[..., 1::2]
    o1 = x1 * cos - x2 * sin
    o2 = x2 * cos + x1 * sin
    if is_neox_style:
        return jnp.concatenate([o1, o2], axis=-1)
    return jnp.stack([o1, o2], axis=-1).reshape(*x.shape)


def rotary_embedding_ref(positions, query, key, cos_sin_cache, *,
                         head_size, rotary_dim, is_neox_style, offsets=None):
    if offsets is not None:
        positions = positions + offsets
    positions = positions.reshape(-1)
    num_tokens = positions.shape[0]
    cos_sin = jnp.take(cos_sin_cache, positions, axis=0)
    cos, sin = jnp.split(cos_sin, 2, axis=-1)

    def one(x):
        shape = x.shape
        x = x.reshape(num_tokens, -1, head_size)
        x_rot = _apply_rotary_emb_ref(x[..., :rotary_dim], cos, sin, is_neox_style)
        x = jnp.concatenate([x_rot, x[..., rotary_dim:]], axis=-1)
        return x.reshape(shape)

    return one(query), one(key)


# ----------------------------------------------------------------------------
if __name__ == "__main__":
    # Module hyper-params (RotaryEmbedding.__init__)
    head_size = 32
    rotary_dim = 32
    max_position_embeddings = 64
    base = 10000
    is_neox_style = True
    dtype = jnp.float32

    # Small example: 40 tokens (not a tile multiple -> exercises padding),
    # 4 query heads, 2 kv heads.
    num_tokens = 40
    num_q_heads = 4
    num_kv_heads = 2

    key0 = jax.random.PRNGKey(0)
    k_pos, k_q, k_k = jax.random.split(key0, 3)

    positions = jax.random.randint(
        k_pos, (num_tokens,), 0, max_position_embeddings, dtype=jnp.int32
    )
    query = jax.random.normal(k_q, (num_tokens, num_q_heads * head_size), dtype=dtype)
    key = jax.random.normal(k_k, (num_tokens, num_kv_heads * head_size), dtype=dtype)

    cos_sin_cache = compute_cos_sin_cache(
        rotary_dim, max_position_embeddings, base, dtype
    )

    # Reference first (kernel aliases its q/k copies to outputs; keep inputs pristine).
    q_ref_out, k_ref_out = rotary_embedding_ref(
        positions, query, key, cos_sin_cache,
        head_size=head_size, rotary_dim=rotary_dim, is_neox_style=is_neox_style,
    )
    jax.block_until_ready((q_ref_out, k_ref_out))

    # Small explicit tile so this tiny test still exercises a multi-step grid
    # plus padding of the ragged last tile (production default is 512, auto-capped
    # to the chip's VMEM budget).
    q_out, k_out = rotary_embedding_forward(
        positions, query, key, cos_sin_cache,
        head_size=head_size, rotary_dim=rotary_dim, is_neox_style=is_neox_style,
        block_tokens=16,
    )
    jax.block_until_ready((q_out, k_out))

    np.testing.assert_allclose(np.asarray(q_out), np.asarray(q_ref_out),
                               rtol=1e-5, atol=1e-5)
    np.testing.assert_allclose(np.asarray(k_out), np.asarray(k_ref_out),
                               rtol=1e-5, atol=1e-5)

    print("KERNEL_OK")
</pallas_src>

<mosaic_0001>
module attributes {stable_mosaic.version = 11 : i64} {
  func.func @_rope_kernel(%arg0: i32, %arg1: memref<16x64xf32, #tpu.memory_space<vmem>>, %arg2: memref<16x128xf32, #tpu.memory_space<vmem>>, %arg3: memref<16x64xf32, #tpu.memory_space<vmem>>, %arg4: memref<16x128xf32, #tpu.memory_space<vmem>>, %arg5: memref<16x64xf32, #tpu.memory_space<vmem>>) attributes {dimension_semantics = [#tpu.dimension_semantics<parallel>], iteration_bounds = array<i64: 3>, scalar_prefetch = 0 : i64, scratch_operands = 0 : i64, tpu.core_type = #tpu.core_type<tc>, window_params = [{transform_indices = @transform_0, window_bounds = array<i64: 16, 64>}, {transform_indices = @transform_1, window_bounds = array<i64: 16, 128>}, {transform_indices = @transform_2, window_bounds = array<i64: 16, 64>}, {transform_indices = @transform_3, window_bounds = array<i64: 16, 128>}, {transform_indices = @transform_4, window_bounds = array<i64: 16, 64>}]} {
    %c0 = arith.constant 0 : index
    %c0_0 = arith.constant 0 : index
    %0 = vector.load %arg1[%c0, %c0_0] : memref<16x64xf32, #tpu.memory_space<vmem>>, vector<16x64xf32>
    %1 = vector.extract_strided_slice %0 {offsets = [0, 0], sizes = [16, 32], strides = [1, 1]} : vector<16x64xf32> to vector<16x32xf32>
    %2 = vector.extract_strided_slice %0 {offsets = [0, 32], sizes = [16, 32], strides = [1, 1]} : vector<16x64xf32> to vector<16x32xf32>
    %3 = vector.extract_strided_slice %1 {offsets = [0, 0], sizes = [16, 16], strides = [1, 1]} : vector<16x32xf32> to vector<16x16xf32>
    %4 = vector.extract_strided_slice %2 {offsets = [0, 16], sizes = [16, 16], strides = [1, 1]} : vector<16x32xf32> to vector<16x16xf32>
    %c0_1 = arith.constant 0 : index
    %c0_2 = arith.constant 0 : index
    %5 = vector.load %arg2[%c0_1, %c0_2] : memref<16x128xf32, #tpu.memory_space<vmem>>, vector<16x128xf32>
    %6 = vector.extract_strided_slice %5 {offsets = [0, 0], sizes = [16, 32], strides = [1, 1]} : vector<16x128xf32> to vector<16x32xf32>
    %7 = vector.extract_strided_slice %6 {offsets = [0, 0], sizes = [16, 16], strides = [1, 1]} : vector<16x32xf32> to vector<16x16xf32>
    %8 = vector.extract_strided_slice %6 {offsets = [0, 16], sizes = [16, 16], strides = [1, 1]} : vector<16x32xf32> to vector<16x16xf32>
    %9 = arith.mulf %7, %3 : vector<16x16xf32>
    %10 = arith.mulf %8, %4 : vector<16x16xf32>
    %11 = arith.subf %9, %10 : vector<16x16xf32>
    %12 = arith.mulf %8, %3 : vector<16x16xf32>
    %13 = arith.mulf %7, %4 : vector<16x16xf32>
    %14 = arith.addf %12, %13 : vector<16x16xf32>
    %15 = tpu.concatenate %11, %14 in 1 : vector<16x16xf32>, vector<16x16xf32> -> vector<16x32xf32>
    %16 = vector.extract_strided_slice %5 {offsets = [0, 32], sizes = [16, 32], strides = [1, 1]} : vector<16x128xf32> to vector<16x32xf32>
    %17 = vector.extract_strided_slice %16 {offsets = [0, 0], sizes = [16, 16], strides = [1, 1]} : vector<16x32xf32> to vector<16x16xf32>
    %18 = vector.extract_strided_slice %16 {offsets = [0, 16], sizes = [16, 16], strides = [1, 1]} : vector<16x32xf32> to vector<16x16xf32>
    %19 = arith.mulf %17, %3 : vector<16x16xf32>
    %20 = arith.mulf %18, %4 : vector<16x16xf32>
    %21 = arith.subf %19, %20 : vector<16x16xf32>
    %22 = arith.mulf %18, %3 : vector<16x16xf32>
    %23 = arith.mulf %17, %4 : vector<16x16xf32>
    %24 = arith.addf %22, %23 : vector<16x16xf32>
    %25 = tpu.concatenate %21, %24 in 1 : vector<16x16xf32>, vector<16x16xf32> -> vector<16x32xf32>
    %26 = vector.extract_strided_slice %5 {offsets = [0, 64], sizes = [16, 32], strides = [1, 1]} : vector<16x128xf32> to vector<16x32xf32>
    %27 = vector.extract_strided_slice %26 {offsets = [0, 0], sizes = [16, 16], strides = [1, 1]} : vector<16x32xf32> to vector<16x16xf32>
    %28 = vector.extract_strided_slice %26 {offsets = [0, 16], sizes = [16, 16], strides = [1, 1]} : vector<16x32xf32> to vector<16x16xf32>
    %29 = arith.mulf %27, %3 : vector<16x16xf32>
    %30 = arith.mulf %28, %4 : vector<16x16xf32>
    %31 = arith.subf %29, %30 : vector<16x16xf32>
    %32 = arith.mulf %28, %3 : vector<16x16xf32>
    %33 = arith.mulf %27, %4 : vector<16x16xf32>
    %34 = arith.addf %32, %33 : vector<16x16xf32>
    %35 = tpu.concatenate %31, %34 in 1 : vector<16x16xf32>, vector<16x16xf32> -> vector<16x32xf32>
    %36 = vector.extract_strided_slice %5 {offsets = [0, 96], sizes = [16, 32], strides = [1, 1]} : vector<16x128xf32> to vector<16x32xf32>
    %37 = vector.extract_strided_slice %36 {offsets = [0, 0], sizes = [16, 16], strides = [1, 1]} : vector<16x32xf32> to vector<16x16xf32>
    %38 = vector.extract_strided_slice %36 {offsets = [0, 16], sizes = [16, 16], strides = [1, 1]} : vector<16x32xf32> to vector<16x16xf32>
    %39 = arith.mulf %37, %3 : vector<16x16xf32>
    %40 = arith.mulf %38, %4 : vector<16x16xf32>
    %41 = arith.subf %39, %40 : vector<16x16xf32>
    %42 = arith.mulf %38, %3 : vector<16x16xf32>
    %43 = arith.mulf %37, %4 : vector<16x16xf32>
    %44 = arith.addf %42, %43 : vector<16x16xf32>
    %45 = tpu.concatenate %41, %44 in 1 : vector<16x16xf32>, vector<16x16xf32> -> vector<16x32xf32>
    %46 = tpu.concatenate %15, %25, %35, %45 in 1 : vector<16x32xf32>, vector<16x32xf32>, vector<16x32xf32>, vector<16x32xf32> -> vector<16x128xf32>
    %c0_3 = arith.constant 0 : index
    %c0_4 = arith.constant 0 : index
    %47 = vector.load %arg4[%c0_3, %c0_4] : memref<16x128xf32, #tpu.memory_space<vmem>>, vector<16x128xf32>
    tpu.vector_store %arg4[%c0_3, %c0_4], %46 {strides = array<i32>} : memref<16x128xf32, #tpu.memory_space<vmem>>, vector<16x128xf32>,
    %c0_5 = arith.constant 0 : index
    %c0_6 = arith.constant 0 : index
    %48 = vector.load %arg3[%c0_5, %c0_6] : memref<16x64xf32, #tpu.memory_space<vmem>>, vector<16x64xf32>
    %49 = vector.extract_strided_slice %48 {offsets = [0, 0], sizes = [16, 32], strides = [1, 1]} : vector<16x64xf32> to vector<16x32xf32>
    %50 = vector.extract_strided_slice %49 {offsets = [0, 0], sizes = [16, 16], strides = [1, 1]} : vector<16x32xf32> to vector<16x16xf32>
    %51 = vector.extract_strided_slice %49 {offsets = [0, 16], sizes = [16, 16], strides = [1, 1]} : vector<16x32xf32> to vector<16x16xf32>
    %52 = arith.mulf %50, %3 : vector<16x16xf32>
    %53 = arith.mulf %51, %4 : vector<16x16xf32>
    %54 = arith.subf %52, %53 : vector<16x16xf32>
    %55 = arith.mulf %51, %3 : vector<16x16xf32>
    %56 = arith.mulf %50, %4 : vector<16x16xf32>
    %57 = arith.addf %55, %56 : vector<16x16xf32>
    %58 = tpu.concatenate %54, %57 in 1 : vector<16x16xf32>, vector<16x16xf32> -> vector<16x32xf32>
    %59 = vector.extract_strided_slice %48 {offsets = [0, 32], sizes = [16, 32], strides = [1, 1]} : vector<16x64xf32> to vector<16x32xf32>
    %60 = vector.extract_strided_slice %59 {offsets = [0, 0], sizes = [16, 16], strides = [1, 1]} : vector<16x32xf32> to vector<16x16xf32>
    %61 = vector.extract_strided_slice %59 {offsets = [0, 16], sizes = [16, 16], strides = [1, 1]} : vector<16x32xf32> to vector<16x16xf32>
    %62 = arith.mulf %60, %3 : vector<16x16xf32>
    %63 = arith.mulf %61, %4 : vector<16x16xf32>
    %64 = arith.subf %62, %63 : vector<16x16xf32>
    %65 = arith.mulf %61, %3 : vector<16x16xf32>
    %66 = arith.mulf %60, %4 : vector<16x16xf32>
    %67 = arith.addf %65, %66 : vector<16x16xf32>
    %68 = tpu.concatenate %64, %67 in 1 : vector<16x16xf32>, vector<16x16xf32> -> vector<16x32xf32>
    %69 = tpu.concatenate %58, %68 in 1 : vector<16x32xf32>, vector<16x32xf32> -> vector<16x64xf32>
    %c0_7 = arith.constant 0 : index
    %c0_8 = arith.constant 0 : index
    %70 = vector.load %arg5[%c0_7, %c0_8] : memref<16x64xf32, #tpu.memory_space<vmem>>, vector<16x64xf32>
    tpu.vector_store %arg5[%c0_7, %c0_8], %69 {strides = array<i32>} : memref<16x64xf32, #tpu.memory_space<vmem>>, vector<16x64xf32>,
    return
  }
  func.func @transform_0(%arg0: i32) -> (i32, i32) {
    %c0_i32 = arith.constant 0 : i32
    %c0_i32_0 = arith.constant 0 : i32
    return %arg0, %c0_i32 : i32, i32
  }
  func.func @transform_1(%arg0: i32) -> (i32, i32) {
    %c0_i32 = arith.constant 0 : i32
    %c0_i32_0 = arith.constant 0 : i32
    return %arg0, %c0_i32 : i32, i32
  }
  func.func @transform_2(%arg0: i32) -> (i32, i32) {
    %c0_i32 = arith.constant 0 : i32
    %c0_i32_0 = arith.constant 0 : i32
    return %arg0, %c0_i32 : i32, i32
  }
  func.func @transform_3(%arg0: i32) -> (i32, i32) {
    %c0_i32 = arith.constant 0 : i32
    %c0_i32_0 = arith.constant 0 : i32
    return %arg0, %c0_i32 : i32, i32
  }
  func.func @transform_4(%arg0: i32) -> (i32, i32) {
    %c0_i32 = arith.constant 0 : i32
    %c0_i32_0 = arith.constant 0 : i32
    return %arg0, %c0_i32 : i32, i32
  }
}

</mosaic_0001>

<llo_original>
// kernel: tpu_custom_call.1
$region0: #{tpu_custom_call.1}
  #allocation0 [shape = 'u32[]', space=smem, size = 0x4, offset = 0x4, fixed_abs, tag = 'smem constant byte address 0x4 - core index']
  #allocation1 [shape = 'u32[144,128]{1,0:T(1,128)}', space=vmem, size = 0x12000, scoped, tag = 'internal scratch']
  %s0 = inlined_call_operand.vmem [shape: f32[48,64], index: 0, kind: input, shape index: {}]
  %s1 = inlined_call_operand.hbm [shape: f32[48,128], index: 1, kind: input, shape index: {}, may-alias: {1,3}]
  %s2 = inlined_call_operand.hbm [shape: f32[48,64], index: 2, kind: input, shape index: {}, may-alias: {2,4}]
  %s3 = inlined_call_operand.hbm [shape: f32[48,128], index: 3, kind: output, shape index: {0}, may-alias: {1,3}]
  %s4 = inlined_call_operand.hbm [shape: f32[48,64], index: 4, kind: output, shape index: {1}, may-alias: {2,4}]
  %5 = xla_tuple %s3, %s4
  %s6 = sld [smem:[#allocation0]]
  $region61: #{tpu_custom_call.1} parent=0
    _
  %s8 = ssub.s32 1, %s6
  %s9 = scalar_select 0, %s8, %s6
  $region1: #{tpu_custom_call.1} parent=0
    #allocation2 [shape = 'u8[16384]{0}', space=vmem, size = 0x4000, scoped, tag = 'input window, operand 1']
    #allocation3 [shape = 's32[2]{0}', space=sflag, size = 0x8, scoped, tag = 'scoped memory for tpu_custom_call.1']
    #allocation4 [shape = 's32[2]{0}', space=sflag, size = 0x8, scoped, tag = 'scoped memory for tpu_custom_call.1']
    #allocation5 [shape = 'u8[16384]{0}', space=vmem, size = 0x4000, scoped, tag = 'input window, operand 2']
    #allocation6 [shape = 's32[2]{0}', space=sflag, size = 0x8, scoped, tag = 'scoped memory for tpu_custom_call.1']
    #allocation7 [shape = 'u8[16384]{0}', space=vmem, size = 0x4000, scoped, tag = 'output window, operand 0']
    #allocation8 [shape = 'u8[16384]{0}', space=vmem, size = 0x4000, scoped, tag = 'output window, operand 1']
    #allocation9 [shape = 's32[2]{0}', space=sflag, size = 0x8, scoped, tag = 'scoped memory for tpu_custom_call.1']
    %10 = vsyncpa [#allocation3], 0
    %s11 = scalar_lea.sflag [#allocation3], 1
    %12 = vsyncpa %s11, 0
    %13 = vsyncpa [#allocation6], 0
    %s14 = scalar_lea.sflag [#allocation6], 1
    %15 = vsyncpa %s14, 0
    %16 = vsyncpa [#allocation4], 0
    %s17 = scalar_lea.sflag [#allocation4], 1
    %18 = vsyncpa %s17, 0
    %19 = vsyncpa [#allocation9], 0
    %s20 = scalar_lea.sflag [#allocation9], 1
    %21 = vsyncpa %s20, 0
    loop: start=0, step=1, limit=5
    $region2: #{tpu_custom_call.1} parent=1 // loop_pre_header
      _
    $region3: #{tpu_custom_call.1} parent=1 // loop_header
      %s23 = sphi 0, %s27
      %p24 = scmp.ge.s32.totalorder %s23, 5
      %s33 = sphi 0, %s35
      %s36 = sphi 0, %s33
      %s37 = sphi 0, %s36
      %s53 = sphi 0, %s37
      %s59 = sphi 0, %s61
      %s62 = sphi 0, %s59
      %s63 = sphi 0, %s62
      %s79 = sphi 0, %s63
      %s85 = sphi 0, %s87
      %s88 = sphi 0, %s85
      %s89 = sphi 0, %s88
      %s105 = sphi 0, %s89
      %s111 = sphi 0, %s113
      %s114 = sphi 0, %s111
      %s115 = sphi 0, %s114
      %s131 = sphi 0, %s115
      %s137 = sphi 0, %s139
      %s140 = sphi 0, %s137
      %s141 = sphi 0, %s140
      %s157 = sphi 0, %s141
    $region4: #{tpu_custom_call.1} parent=1 // loop_header_branch
      %26 = sbr.rel (%p24) target = $region8
    $region5: #{tpu_custom_call.1} parent=1 // loop_body
      %s28 = ssub.s32 %s23, 1
      %s29 = ssub.s32 %s23, 2
      %s30 = sadd.s32 %s23, 1
      %s31 = ssub.s32 %s23, %s30
      %p32 = scmp.eq.s32.totalorder %s31, 0
      %s34 = sadd.s32 %s33, 1
      %s35 = scalar_select %p32, %s33, %s34
      %p38 = pneg %p32
      %p39 = scmp.eq.s32.totalorder %s23, 2
      %p40 = por %p38, %p39
      %p41 = scmp.ne.s32.totalorder %s33, %s36
      %p42 = scmp.eq.s32.totalorder %s23, 0
      %p43 = por %p41, %p42
      %p44 = scmp.ne.s32.totalorder %s33, %s36
      %p45 = scmp.eq.s32.totalorder %s28, 2
      %p46 = por %p44, %p45
      %p47 = scmp.ne.s32.totalorder %s36, %s37
      %p48 = scmp.eq.s32.totalorder %s28, 0
      %p49 = por %p47, %p48
      %p50 = scmp.ne.s32.totalorder %s36, %s37
      %p51 = scmp.eq.s32.totalorder %s29, 2
      %p52 = por %p50, %p51
      %p54 = scmp.ne.s32.totalorder %s37, %s53
      %p55 = scmp.eq.s32.totalorder %s29, 0
      %p56 = por %p54, %p55
      %s57 = ssub.s32 %s23, %s30
      %p58 = scmp.eq.s32.totalorder %s57, 0
      %s60 = sadd.s32 %s59, 1
      %s61 = scalar_select %p58, %s59, %s60
      %p64 = pneg %p58
      %p65 = scmp.eq.s32.totalorder %s23, 2
      %p66 = por %p64, %p65
      %p67 = scmp.ne.s32.totalorder %s59, %s62
      %p68 = scmp.eq.s32.totalorder %s23, 0
      %p69 = por %p67, %p68
      %p70 = scmp.ne.s32.totalorder %s59, %s62
      %p71 = scmp.eq.s32.totalorder %s28, 2
      %p72 = por %p70, %p71
      %p73 = scmp.ne.s32.totalorder %s62, %s63
      %p74 = scmp.eq.s32.totalorder %s28, 0
      %p75 = por %p73, %p74
      %p76 = scmp.ne.s32.totalorder %s62, %s63
      %p77 = scmp.eq.s32.totalorder %s29, 2
      %p78 = por %p76, %p77
      %p80 = scmp.ne.s32.totalorder %s63, %s79
      %p81 = scmp.eq.s32.totalorder %s29, 0
      %p82 = por %p80, %p81
      %s83 = ssub.s32 %s23, %s30
      %p84 = scmp.eq.s32.totalorder %s83, 0
      %s86 = sadd.s32 %s85, 1
      %s87 = scalar_select %p84, %s85, %s86
      %p90 = pneg %p84
      %p91 = scmp.eq.s32.totalorder %s23, 2
      %p92 = por %p90, %p91
      %p93 = scmp.ne.s32.totalorder %s85, %s88
      %p94 = scmp.eq.s32.totalorder %s23, 0
      %p95 = por %p93, %p94
      %p96 = scmp.ne.s32.totalorder %s85, %s88
      %p97 = scmp.eq.s32.totalorder %s28, 2
      %p98 = por %p96, %p97
      %p99 = scmp.ne.s32.totalorder %s88, %s89
      %p100 = scmp.eq.s32.totalorder %s28, 0
      %p101 = por %p99, %p100
      %p102 = scmp.ne.s32.totalorder %s88, %s89
      %p103 = scmp.eq.s32.totalorder %s29, 2
      %p104 = por %p102, %p103
      %p106 = scmp.ne.s32.totalorder %s89, %s105
      %p107 = scmp.eq.s32.totalorder %s29, 0
      %p108 = por %p106, %p107
      %s109 = ssub.s32 %s23, %s30
      %p110 = scmp.eq.s32.totalorder %s109, 0
      %s112 = sadd.s32 %s111, 1
      %s113 = scalar_select %p110, %s111, %s112
      %p116 = pneg %p110
      %p117 = scmp.eq.s32.totalorder %s23, 2
      %p118 = por %p116, %p117
      %p119 = scmp.ne.s32.totalorder %s111, %s114
      %p120 = scmp.eq.s32.totalorder %s23, 0
      %p121 = por %p119, %p120
      %p122 = scmp.ne.s32.totalorder %s111, %s114
      %p123 = scmp.eq.s32.totalorder %s28, 2
      %p124 = por %p122, %p123
      %p125 = scmp.ne.s32.totalorder %s114, %s115
      %p126 = scmp.eq.s32.totalorder %s28, 0
      %p127 = por %p125, %p126
      %p128 = scmp.ne.s32.totalorder %s114, %s115
      %p129 = scmp.eq.s32.totalorder %s29, 2
      %p130 = por %p128, %p129
      %p132 = scmp.ne.s32.totalorder %s115, %s131
      %p133 = scmp.eq.s32.totalorder %s29, 0
      %p134 = por %p132, %p133
      %s135 = ssub.s32 %s23, %s30
      %p136 = scmp.eq.s32.totalorder %s135, 0
      %s138 = sadd.s32 %s137, 1
      %s139 = scalar_select %p136, %s137, %s138
      %p142 = pneg %p136
      %p143 = scmp.eq.s32.totalorder %s23, 2
      %p144 = por %p142, %p143
      %p145 = scmp.ne.s32.totalorder %s137, %s140
      %p146 = scmp.eq.s32.totalorder %s23, 0
      %p147 = por %p145, %p146
      %p148 = scmp.ne.s32.totalorder %s137, %s140
      %p149 = scmp.eq.s32.totalorder %s28, 2
      %p150 = por %p148, %p149
      %p151 = scmp.ne.s32.totalorder %s140, %s141
      %p152 = scmp.eq.s32.totalorder %s28, 0
      %p153 = por %p151, %p152
      %p154 = scmp.ne.s32.totalorder %s140, %s141
      %p155 = scmp.eq.s32.totalorder %s29, 2
      %p156 = por %p154, %p155
      %p158 = scmp.ne.s32.totalorder %s141, %s157
      %p159 = scmp.eq.s32.totalorder %s29, 0
      %p160 = por %p158, %p159
      %p161 = scmp.le.s32.totalorder 1, %s23
      %p162 = scmp.lt.s32.totalorder %s23, 4
      %p163 = pnand %p161, %p162
      %p164 = pneg %p163
      // Predicated region
      $region9: #{tpu_custom_call.1} parent=5 // pred_check
        _
      $region10: #{tpu_custom_call.1} parent=5 // pred_check_branch
        %166 = sbr.rel (%p163) target = $region12
      $region11: #{tpu_custom_call.1} parent=5 // pred_region
        %s167 = ssub.s32 %s23, 1
      $region12: #{tpu_custom_call.1} parent=5 // pred_fallthru
        _
      %p168 = scmp.lt.s32.totalorder %s23, 3
      // Predicated region
      $region13: #{tpu_custom_call.1} parent=5 // pred_check
        %p169 = pneg %p168
      $region14: #{tpu_custom_call.1} parent=5 // pred_check_branch
        %171 = sbr.rel (%p169) target = $region16
      $region15: #{tpu_custom_call.1} parent=5 // pred_region
        // Predicated region
        $region17: #{tpu_custom_call.1} parent=15 // pred_check
          %p172 = pneg %p43
        $region18: #{tpu_custom_call.1} parent=15 // pred_check_branch
          %174 = sbr.rel (%p172) target = $region20
        $region19: #{tpu_custom_call.1} parent=15 // pred_region
          %s175 = smul.u32 2, %s23
          %p176 = scmp.lt.s32.totalorder %s175, 5
          %s177 = scalar_select %p176, %s175, 5
          %s178 = smul.addr %s177, 8
          %s179 = scalar_lea.vmem %s0, %s178
          %s180 = smul.u32 2, %s23
        $region20: #{tpu_custom_call.1} parent=15 // pred_fallthru
          _
        // Predicated region
        $region21: #{tpu_custom_call.1} parent=15 // pred_check
          %p181 = pneg %p69
        $region22: #{tpu_custom_call.1} parent=15 // pred_check_branch
          %183 = sbr.rel (%p181) target = $region24
        $region23: #{tpu_custom_call.1} parent=15 // pred_region
          %s184 = sand.u32 %s59, 1
          %s185 = scalar_lea.sflag [#allocation3], %s184
          %s186 = sand.u32 %s59, 1
          %s187 = smul.addr %s186, 16
          %s188 = scalar_lea.vmem [#allocation2], %s187
          %s189 = smul.u32 2, %s23
          %s191 = ssub.s32 256, 256
          %192 = vsyncadd %s185, %s191
          %s193 = smul.addr %s189, 128
          %s194 = scalar_lea.hbm %s1, %s193
          %s195 = sshll.u32 %s188, 4
          %s196 = int_to_ptr.vmem [resolvable:$true] %s195
          %201 = dma.hbm_to_vmem [thread:$0]  %s194, 256, %s196, %s185, 128, 128, 8
        $region24: #{tpu_custom_call.1} parent=15 // pred_fallthru
          _
        // Predicated region
        $region25: #{tpu_custom_call.1} parent=15 // pred_check
          %p202 = pneg %p95
        $region26: #{tpu_custom_call.1} parent=15 // pred_check_branch
          %204 = sbr.rel (%p202) target = $region28
        $region27: #{tpu_custom_call.1} parent=15 // pred_region
          %s205 = sand.u32 %s85, 1
          %s206 = scalar_lea.sflag [#allocation6], %s205
          %s207 = sand.u32 %s85, 1
          %s208 = smul.addr %s207, 16
          %s209 = scalar_lea.vmem [#allocation5], %s208
          %s210 = smul.u32 2, %s23
          %s212 = ssub.s32 256, 256
          %213 = vsyncadd %s206, %s212
          %s214 = smul.addr %s210, 128
          %s215 = scalar_lea.hbm %s2, %s214
          %s216 = sshll.u32 %s209, 4
          %s217 = int_to_ptr.vmem [resolvable:$true] %s216
          %222 = dma.hbm_to_vmem [thread:$0]  %s215, 256, %s217, %s206, 128, 128, 8
        $region28: #{tpu_custom_call.1} parent=15 // pred_fallthru
          _
      $region16: #{tpu_custom_call.1} parent=5 // pred_fallthru
        _
      %p223 = scmp.le.s32.totalorder 1, %s23
      %p224 = scmp.lt.s32.totalorder %s23, 4
      %p225 = pnand %p223, %p224
      %p226 = pneg %p225
      // Predicated region
      $region29: #{tpu_custom_call.1} parent=5 // pred_check
        _
      $region30: #{tpu_custom_call.1} parent=5 // pred_check_branch
        %228 = sbr.rel (%p225) target = $region32
      $region31: #{tpu_custom_call.1} parent=5 // pred_region
        %s229 = ssub.s32 %s23, 1
        %s230 = sand.u32 %s62, 1
        %s231 = scalar_lea.sflag [#allocation3], %s230
        %s232 = sand.u32 %s62, 1
        %s233 = smul.addr %s232, 16
        %s234 = scalar_lea.vmem [#allocation2], %s233
        // Predicated region
        $region33: #{tpu_custom_call.1} parent=31 // pred_check
          %p235 = pneg %p75
        $region34: #{tpu_custom_call.1} parent=31 // pred_check_branch
          %237 = sbr.rel (%p235) target = $region36
        $region35: #{tpu_custom_call.1} parent=31 // pred_region
          %238 = dma.done %s231, 256
        $region36: #{tpu_custom_call.1} parent=31 // pred_fallthru
          _
        %s239 = sand.u32 %s88, 1
        %s240 = scalar_lea.sflag [#allocation6], %s239
        %s241 = sand.u32 %s88, 1
        %s242 = smul.addr %s241, 16
        %s243 = scalar_lea.vmem [#allocation5], %s242
        // Predicated region
        $region37: #{tpu_custom_call.1} parent=31 // pred_check
          %p244 = pneg %p101
        $region38: #{tpu_custom_call.1} parent=31 // pred_check_branch
          %246 = sbr.rel (%p244) target = $region40
        $region39: #{tpu_custom_call.1} parent=31 // pred_region
          %247 = dma.done %s240, 256
        $region40: #{tpu_custom_call.1} parent=31 // pred_fallthru
          _
        %s248 = smul.u32 2, %s28
        %p249 = scmp.lt.s32.totalorder %s248, 5
        %s250 = scalar_select %p249, %s248, 5
        %s251 = smul.addr %s250, 8
        %s252 = scalar_lea.vmem %s0, %s251
        %p253 = pneg %p49
        %p254 = pneg %p46
        %s255 = sand.u32 %s62, 1
        %s256 = scalar_lea.sflag [#allocation3], %s255
        %s257 = sand.u32 %s62, 1
        %s258 = smul.addr %s257, 16
        %s259 = scalar_lea.vmem [#allocation2], %s258
        %p260 = pneg %p75
        %p261 = pneg %p72
        %s262 = sand.u32 %s88, 1
        %s263 = scalar_lea.sflag [#allocation6], %s262
        %s264 = sand.u32 %s88, 1
        %s265 = smul.addr %s264, 16
        %s266 = scalar_lea.vmem [#allocation5], %s265
        %p267 = pneg %p101
        %p268 = pneg %p98
        %p269 = pneg %p127
        %p270 = pneg %p124
        %s271 = sand.u32 %s114, 1
        %s272 = scalar_lea.sflag [#allocation4], %s271
        %s273 = sand.u32 %s114, 1
        %s274 = smul.addr %s273, 16
        %s275 = scalar_lea.vmem [#allocation7], %s274
        %p276 = pneg %p153
        %p277 = pneg %p150
        %s278 = sand.u32 %s140, 1
        %s279 = scalar_lea.sflag [#allocation9], %s278
        %s280 = sand.u32 %s140, 1
        %s281 = smul.addr %s280, 16
        %s282 = scalar_lea.vmem [#allocation8], %s281
        %s283 = smul.u32 2, %s28
        %p284 = scmp.lt.s32.totalorder %s283, 5
        %s285 = scalar_select %p284, %s283, 5
        %s286 = smul.addr %s285, 8
        %s287 = scalar_lea.vmem %s0, %s286
        %s288 = smul.u32 2, %s28
        %s289 = smul.u32 2, %s28
        %s290 = smul.u32 2, %s28
        %s291 = smul.u32 2, %s28
        %s292 = smul.u32 2, %s28
        %v293 = vld [vmem:[%s287] sm:$0xff]
        %v294 = vld [vmem:[%s287 + $0x8] sm:$0xff]
        %v295 = vld [vmem:[%s234] sm:$0xff]
        %v296 = vld [vmem:[%s234 + $0x8] sm:$0xff]
        %v297 = vmul.f32 %v295, %v293
        %v298 = vmul.f32 %v296, %v294
        %301 = vrot.lane.b32.xlu0 %v293, 96
        %v302 = vpop.permute.xlu0 %301
        %303 = vrot.lane.b32.xlu0 %v294, 96
        %v304 = vpop.permute.xlu0 %303
        %v307 = vmul.f32 %v295, %v302
        %v308 = vmul.f32 %v296, %v304
        %311 = vrot.lane.b32.xlu0 %v307, 112
        %v312 = vpop.permute.xlu0 %311
        %313 = vrot.lane.b32.xlu0 %v308, 112
        %v314 = vpop.permute.xlu0 %313
        %v317 = vsub.f32 %v297, %v312
        %v318 = vsub.f32 %v298, %v314
        %319 = vrot.lane.b32.xlu0 %v293, 16
        %v320 = vpop.permute.xlu0 %319
        %321 = vrot.lane.b32.xlu0 %v294, 16
        %v322 = vpop.permute.xlu0 %321
        %v325 = vmul.f32 %v295, %v320
        %v326 = vmul.f32 %v296, %v322
        %327 = vrot.lane.b32.xlu0 %v293, 80
        %v328 = vpop.permute.xlu0 %327
        %329 = vrot.lane.b32.xlu0 %v294, 80
        %v330 = vpop.permute.xlu0 %329
        %v333 = vmul.f32 %v295, %v328
        %v334 = vmul.f32 %v296, %v330
        %337 = vrot.lane.b32.xlu0 %v333, 16
        %v338 = vpop.permute.xlu0 %337
        %339 = vrot.lane.b32.xlu0 %v334, 16
        %v340 = vpop.permute.xlu0 %339
        %v343 = vadd.f32 %v325, %v338
        %v344 = vadd.f32 %v326, %v340
        %vm345 = vcmask 130048
        %v346 = vsel %vm345, %v317, %v343
        %v347 = vsel %vm345, %v318, %v344
        %348 = vrot.lane.b32.xlu0 %v293, 32
        %v349 = vpop.permute.xlu0 %348
        %350 = vrot.lane.b32.xlu0 %v294, 32
        %v351 = vpop.permute.xlu0 %350
        %v354 = vmul.f32 %v295, %v349
        %v355 = vmul.f32 %v296, %v351
        %358 = vrot.lane.b32.xlu0 %v297, 112
        %v359 = vpop.permute.xlu0 %358
        %360 = vrot.lane.b32.xlu0 %v298, 112
        %v361 = vpop.permute.xlu0 %360
        %v364 = vsub.f32 %v354, %v359
        %v365 = vsub.f32 %v355, %v361
        %366 = vrot.lane.b32.xlu0 %v293, 48
        %v367 = vpop.permute.xlu0 %366
        %368 = vrot.lane.b32.xlu0 %v294, 48
        %v369 = vpop.permute.xlu0 %368
        %v372 = vmul.f32 %v295, %v367
        %v373 = vmul.f32 %v296, %v369
        %374 = vrot.lane.b32.xlu0 %v293, 112
        %v375 = vpop.permute.xlu0 %374
        %376 = vrot.lane.b32.xlu0 %v294, 112
        %v377 = vpop.permute.xlu0 %376
        %v380 = vmul.f32 %v295, %v375
        %v381 = vmul.f32 %v296, %v377
        %384 = vrot.lane.b32.xlu0 %v380, 16
        %v385 = vpop.permute.xlu0 %384
        %386 = vrot.lane.b32.xlu0 %v381, 16
        %v387 = vpop.permute.xlu0 %386
        %v390 = vadd.f32 %v372, %v385
        %v391 = vadd.f32 %v373, %v387
        %394 = vrot.lane.b32.xlu0 %v364, 96
        %v395 = vpop.permute.xlu0 %394
        %396 = vrot.lane.b32.xlu0 %v365, 96
        %v397 = vpop.permute.xlu0 %396
        %402 = vrot.lane.b32.xlu0 %v390, 96
        %v403 = vpop.permute.xlu0 %402
        %404 = vrot.lane.b32.xlu0 %v391, 96
        %v405 = vpop.permute.xlu0 %404
        %v408 = vsel %vm345, %v395, %v403
        %v409 = vsel %vm345, %v397, %v405
        %410 = vrot.lane.b32.xlu0 %v293, 64
        %v411 = vpop.permute.xlu0 %410
        %412 = vrot.lane.b32.xlu0 %v294, 64
        %v413 = vpop.permute.xlu0 %412
        %v416 = vmul.f32 %v295, %v411
        %v417 = vmul.f32 %v296, %v413
        %420 = vrot.lane.b32.xlu0 %v354, 112
        %v421 = vpop.permute.xlu0 %420
        %422 = vrot.lane.b32.xlu0 %v355, 112
        %v423 = vpop.permute.xlu0 %422
        %v426 = vsub.f32 %v416, %v421
        %v427 = vsub.f32 %v417, %v423
        %430 = vrot.lane.b32.xlu0 %v325, 16
        %v431 = vpop.permute.xlu0 %430
        %432 = vrot.lane.b32.xlu0 %v326, 16
        %v433 = vpop.permute.xlu0 %432
        %v436 = vadd.f32 %v333, %v431
        %v437 = vadd.f32 %v334, %v433
        %440 = vrot.lane.b32.xlu0 %v426, 64
        %v441 = vpop.permute.xlu0 %440
        %442 = vrot.lane.b32.xlu0 %v427, 64
        %v443 = vpop.permute.xlu0 %442
        %448 = vrot.lane.b32.xlu0 %v436, 64
        %v449 = vpop.permute.xlu0 %448
        %450 = vrot.lane.b32.xlu0 %v437, 64
        %v451 = vpop.permute.xlu0 %450
        %v454 = vsel %vm345, %v441, %v449
        %v455 = vsel %vm345, %v443, %v451
        %458 = vrot.lane.b32.xlu0 %v416, 112
        %v459 = vpop.permute.xlu0 %458
        %460 = vrot.lane.b32.xlu0 %v417, 112
        %v461 = vpop.permute.xlu0 %460
        %v464 = vsub.f32 %v307, %v459
        %v465 = vsub.f32 %v308, %v461
        %468 = vrot.lane.b32.xlu0 %v372, 16
        %v469 = vpop.permute.xlu0 %468
        %470 = vrot.lane.b32.xlu0 %v373, 16
        %v471 = vpop.permute.xlu0 %470
        %v474 = vadd.f32 %v380, %v469
        %v475 = vadd.f32 %v381, %v471
        %478 = vrot.lane.b32.xlu0 %v464, 32
        %v479 = vpop.permute.xlu0 %478
        %480 = vrot.lane.b32.xlu0 %v465, 32
        %v481 = vpop.permute.xlu0 %480
        %486 = vrot.lane.b32.xlu0 %v474, 32
        %v487 = vpop.permute.xlu0 %486
        %488 = vrot.lane.b32.xlu0 %v475, 32
        %v489 = vpop.permute.xlu0 %488
        %v492 = vsel %vm345, %v479, %v487
        %v493 = vsel %vm345, %v481, %v489
        %496 = vrot.lane.b32.xlu0 %v408, 32
        %v497 = vpop.permute.xlu0 %496
        %498 = vrot.lane.b32.xlu0 %v409, 32
        %v499 = vpop.permute.xlu0 %498
        %504 = vrot.lane.b32.xlu0 %v454, 64
        %v505 = vpop.permute.xlu0 %504
        %506 = vrot.lane.b32.xlu0 %v455, 64
        %v507 = vpop.permute.xlu0 %506
        %512 = vrot.lane.b32.xlu0 %v492, 96
        %v513 = vpop.permute.xlu0 %512
        %514 = vrot.lane.b32.xlu0 %v493, 96
        %v515 = vpop.permute.xlu0 %514
        %vm518 = vcmask 261120
        %v519 = vsel %vm518, %v346, %v497
        %v520 = vsel %vm518, %v347, %v499
        %vm521 = vcmask 523264
        %v522 = vsel %vm521, %v519, %v505
        %v523 = vsel %vm521, %v520, %v507
        %vm524 = vcmask 785408
        %v525 = vsel %vm524, %v522, %v513
        %v526 = vsel %vm524, %v523, %v515
        %527 = vst [vmem:[%s275] sm:$0xff] %v525
        %528 = vst [vmem:[%s275 + $0x8] sm:$0xff] %v526
        %v529 = vld [vmem:[%s243] sm:$0xff]
        %v530 = vld [vmem:[%s243 + $0x8] sm:$0xff]
        %v531 = vmul.f32 %v529, %v293
        %v532 = vmul.f32 %v530, %v294
        %v533 = vmul.f32 %v529, %v302
        %v534 = vmul.f32 %v530, %v304
        %537 = vrot.lane.b32.xlu0 %v533, 112
        %v538 = vpop.permute.xlu0 %537
        %539 = vrot.lane.b32.xlu0 %v534, 112
        %v540 = vpop.permute.xlu0 %539
        %v543 = vsub.f32 %v531, %v538
        %v544 = vsub.f32 %v532, %v540
        %v545 = vmul.f32 %v529, %v320
        %v546 = vmul.f32 %v530, %v322
        %v547 = vmul.f32 %v529, %v328
        %v548 = vmul.f32 %v530, %v330
        %551 = vrot.lane.b32.xlu0 %v547, 16
        %v552 = vpop.permute.xlu0 %551
        %553 = vrot.lane.b32.xlu0 %v548, 16
        %v554 = vpop.permute.xlu0 %553
        %v557 = vadd.f32 %v545, %v552
        %v558 = vadd.f32 %v546, %v554
        %v559 = vsel %vm345, %v543, %v557
        %v560 = vsel %vm345, %v544, %v558
        %v561 = vmul.f32 %v529, %v349
        %v562 = vmul.f32 %v530, %v351
        %565 = vrot.lane.b32.xlu0 %v531, 112
        %v566 = vpop.permute.xlu0 %565
        %567 = vrot.lane.b32.xlu0 %v532, 112
        %v568 = vpop.permute.xlu0 %567
        %v571 = vsub.f32 %v561, %v566
        %v572 = vsub.f32 %v562, %v568
        %v573 = vmul.f32 %v529, %v367
        %v574 = vmul.f32 %v530, %v369
        %v575 = vmul.f32 %v529, %v375
        %v576 = vmul.f32 %v530, %v377
        %579 = vrot.lane.b32.xlu0 %v575, 16
        %v580 = vpop.permute.xlu0 %579
        %581 = vrot.lane.b32.xlu0 %v576, 16
        %v582 = vpop.permute.xlu0 %581
        %v585 = vadd.f32 %v573, %v580
        %v586 = vadd.f32 %v574, %v582
        %589 = vrot.lane.b32.xlu0 %v571, 96
        %v590 = vpop.permute.xlu0 %589
        %591 = vrot.lane.b32.xlu0 %v572, 96
        %v592 = vpop.permute.xlu0 %591
        %597 = vrot.lane.b32.xlu0 %v585, 96
        %v598 = vpop.permute.xlu0 %597
        %599 = vrot.lane.b32.xlu0 %v586, 96
        %v600 = vpop.permute.xlu0 %599
        %v603 = vsel %vm345, %v590, %v598
        %v604 = vsel %vm345, %v592, %v600
        %607 = vrot.lane.b32.xlu0 %v603, 32
        %v608 = vpop.permute.xlu0 %607
        %609 = vrot.lane.b32.xlu0 %v604, 32
        %v610 = vpop.permute.xlu0 %609
        %v613 = vsel %vm518, %v559, %v608
        %v614 = vsel %vm518, %v560, %v610
        %615 = vst.msk [vmem:[%s282] sm:$0xff] %vm521, %v613
        %616 = vst.msk [vmem:[%s282 + $0x8] sm:$0xff] %vm521, %v614
        %s617 = sand.u32 %s114, 1
        %s618 = scalar_lea.sflag [#allocation4], %s617
        %s619 = sand.u32 %s114, 1
        %s620 = smul.addr %s619, 16
        %s621 = scalar_lea.vmem [#allocation7], %s620
        %s622 = sand.u32 %s140, 1
        %s623 = scalar_lea.sflag [#allocation9], %s622
        %s624 = sand.u32 %s140, 1
        %s625 = smul.addr %s624, 16
        %s626 = scalar_lea.vmem [#allocation8], %s625
        // Predicated region
        $region41: #{tpu_custom_call.1} parent=31 // pred_check
          %p627 = pneg %p124
        $region42: #{tpu_custom_call.1} parent=31 // pred_check_branch
          %629 = sbr.rel (%p627) target = $region44
        $region43: #{tpu_custom_call.1} parent=31 // pred_region
          %s630 = smul.u32 2, %s28
          %s632 = ssub.s32 256, 256
          %633 = vsyncadd %s618, %s632
          %s634 = smul.addr %s630, 128
          %s635 = scalar_lea.hbm %s3, %s634
          %s636 = sshll.u32 %s621, 4
          %s637 = int_to_ptr.vmem [resolvable:$true] %s636
          %642 = dma.vmem_to_hbm [thread:$0]  %s637, 256, %s635, %s618, 128, 128, 8
        $region44: #{tpu_custom_call.1} parent=31 // pred_fallthru
          _
        // Predicated region
        $region45: #{tpu_custom_call.1} parent=31 // pred_check
          %p643 = pneg %p150
        $region46: #{tpu_custom_call.1} parent=31 // pred_check_branch
          %645 = sbr.rel (%p643) target = $region48
        $region47: #{tpu_custom_call.1} parent=31 // pred_region
          %s646 = smul.u32 2, %s28
          %s648 = ssub.s32 256, 256
          %649 = vsyncadd %s623, %s648
          %s650 = smul.addr %s646, 128
          %s651 = scalar_lea.hbm %s4, %s650
          %s652 = sshll.u32 %s626, 4
          %s653 = int_to_ptr.vmem [resolvable:$true] %s652
          %658 = dma.vmem_to_hbm [thread:$0]  %s653, 256, %s651, %s623, 128, 128, 8
        $region48: #{tpu_custom_call.1} parent=31 // pred_fallthru
          _
      $region32: #{tpu_custom_call.1} parent=5 // pred_fallthru
        _
      %p659 = scmp.le.s32.totalorder 2, %s23
      // Predicated region
      $region49: #{tpu_custom_call.1} parent=5 // pred_check
        %p660 = pneg %p659
      $region50: #{tpu_custom_call.1} parent=5 // pred_check_branch
        %662 = sbr.rel (%p660) target = $region52
      $region51: #{tpu_custom_call.1} parent=5 // pred_region
        %s663 = ssub.s32 %s23, 2
        // Predicated region
        $region53: #{tpu_custom_call.1} parent=51 // pred_check
          %p664 = pneg %p130
        $region54: #{tpu_custom_call.1} parent=51 // pred_check_branch
          %666 = sbr.rel (%p664) target = $region56
        $region55: #{tpu_custom_call.1} parent=51 // pred_region
          %s667 = sand.u32 %s115, 1
          %s668 = scalar_lea.sflag [#allocation4], %s667
          %s669 = sand.u32 %s115, 1
          %s670 = smul.addr %s669, 16
          %s671 = scalar_lea.vmem [#allocation7], %s670
          %672 = dma.done %s668, 256
        $region56: #{tpu_custom_call.1} parent=51 // pred_fallthru
          _
        // Predicated region
        $region57: #{tpu_custom_call.1} parent=51 // pred_check
          %p673 = pneg %p156
        $region58: #{tpu_custom_call.1} parent=51 // pred_check_branch
          %675 = sbr.rel (%p673) target = $region60
        $region59: #{tpu_custom_call.1} parent=51 // pred_region
          %s676 = sand.u32 %s141, 1
          %s677 = scalar_lea.sflag [#allocation9], %s676
          %s678 = sand.u32 %s141, 1
          %s679 = smul.addr %s678, 16
          %s680 = scalar_lea.vmem [#allocation8], %s679
          %681 = dma.done %s677, 256
        $region60: #{tpu_custom_call.1} parent=51 // pred_fallthru
          _
      $region52: #{tpu_custom_call.1} parent=5 // pred_fallthru
        _
    $region6: #{tpu_custom_call.1} parent=1 // loop_footer
      %s27 = sadd.s32 1, %s23
    $region7: #{tpu_custom_call.1} parent=1 // loop_footer_branch
      %22 = sbr.rel target = $region3
    $region8: #{tpu_custom_call.1} parent=1 // loop_exit
      _
    %682 = vsyncpa [#allocation3], 1
    %s683 = scalar_lea.sflag [#allocation3], 1
    %684 = vsyncpa %s683, 1
    %685 = vsyncpa [#allocation6], 1
    %s686 = scalar_lea.sflag [#allocation6], 1
    %687 = vsyncpa %s686, 1
    %688 = vsyncpa [#allocation4], 1
    %s689 = scalar_lea.sflag [#allocation4], 1
    %690 = vsyncpa %s689, 1
    %691 = vsyncpa [#allocation9], 1
    %s692 = scalar_lea.sflag [#allocation9], 1
    %693 = vsyncpa %s692, 1

</llo_original>
